<compile_context>
chip_gen: v7x
topology: tpu7x:2x2x1
jax: 0.10.0
libtpu: 0.0.40
codegen_flags: <defaults>
</compile_context>

<pallas_src>
import jax
import jax.numpy as jnp
from jax import lax
from jax.experimental import pallas as pl
from jax.experimental.pallas import tpu as pltpu

_LANE = 128
_VMEM_TABLE_BYTES_LIMIT = 32 << 20   # conservative across v5e/v6e (128 MiB) and v7x (64 MiB)


def _round_up(x, m):
    return ((x + m - 1) // m) * m


def _min_sublane(dtype):
    # Native sublane tile height: 8 rows for 4-byte, 16 for 2-byte, 32 for 1-byte dtypes.
    return max(8, 32 // jnp.dtype(dtype).itemsize)


def _dropout_params(dropout_p, training):
    apply_dropout = bool(training) and float(dropout_p) > 0.0
    keep_scale = 1.0 / (1.0 - float(dropout_p)) if apply_dropout else 1.0
    # Keep iff low 24 hash bits >= p * 2^24 (<= 2^-24 bias for arbitrary p; negligible).
    threshold = min(int(round(float(dropout_p) * (1 << 24))), (1 << 24) - 1) if apply_dropout else 0
    return apply_dropout, keep_scale, threshold


def _dropout_keep_mask(seed_u32, row_base_i32, shape, threshold_24):
    """Counter-based keep mask: lowbias32 hash of (seed, global flat element index)."""
    rows, cols = shape
    r = lax.broadcasted_iota(jnp.int32, shape, 0)
    c = lax.broadcasted_iota(jnp.int32, shape, 1)
    flat = (row_base_i32 + r) * cols + c
    x = flat.astype(jnp.uint32) ^ (seed_u32 * jnp.uint32(0x9E3779B9))
    x = x ^ (x >> jnp.uint32(16))
    x = x * jnp.uint32(0x7FEB352D)
    x = x ^ (x >> jnp.uint32(15))
    x = x * jnp.uint32(0x846CA68B)
    x = x ^ (x >> jnp.uint32(16))
    return (x & jnp.uint32(0x00FFFFFF)) >= jnp.uint32(threshold_24)


def _make_gather_kernel(rows_per_step, dropout_p, training):
    """HBM-resident table: double-buffered per-row DMA gather + fused dropout."""
    apply_dropout, keep_scale, threshold = _dropout_params(dropout_p, training)

    def kernel(ids_ref, seed_ref, table_hbm, out_ref, gather_buf, copy_sems):
        inner = pl.program_id(1)
        n_inner = pl.num_programs(1)
        step = pl.program_id(0) * n_inner + inner          # global tile index

        def start_fetch(step_idx, slot):
            base = step_idx * rows_per_step
            for j in range(rows_per_step):
                pltpu.make_async_copy(
                    table_hbm.at[pl.ds(ids_ref[base + j], 1), :],
                    gather_buf.at[slot, pl.ds(j, 1), :],
                    copy_sems.at[slot],                    # one shared sem per slot
                ).start()

        # Prime this chunk's first tile ...
        @pl.when(inner == 0)
        def _():
            start_fetch(step, 0)

        # ... and prefetch the next tile into the other slot (double buffering):
        # its HBM round-trip overlaps this tile's dropout + output writeback.
        @pl.when(inner + 1 < n_inner)
        def _():
            start_fetch(step + 1, (inner + 1) % 2)

        slot = inner % 2
        # Aggregate wait: all rows_per_step row-DMAs of this slot signal the same
        # semaphore; wait once for their combined size (no per-row wait chain).
        pltpu.make_async_copy(gather_buf.at[slot], gather_buf.at[slot],
                              copy_sems.at[slot]).wait()

        emb = gather_buf[slot]
        if apply_dropout:
            keep = _dropout_keep_mask(seed_ref[0].astype(jnp.uint32),
                                      step * rows_per_step, emb.shape, threshold)
            emb = jnp.where(keep, emb.astype(jnp.float32) * keep_scale, 0.0)
        out_ref[...] = emb.astype(out_ref.dtype)

    return kernel


def _make_vmem_kernel(rows_per_step, dropout_p, training):
    """VMEM-resident table fast path: dynamic row indexing, no per-row HBM DMAs."""
    apply_dropout, keep_scale, threshold = _dropout_params(dropout_p, training)

    def kernel(ids_ref, seed_ref, table_ref, out_ref):
        step = pl.program_id(0)
        base = step * rows_per_step
        rows = [table_ref[pl.ds(ids_ref[base + j], 1), :] for j in range(rows_per_step)]
        emb = jnp.concatenate(rows, axis=0)
        if apply_dropout:
            keep = _dropout_keep_mask(seed_ref[0].astype(jnp.uint32),
                                      base, emb.shape, threshold)
            emb = jnp.where(keep, emb.astype(jnp.float32) * keep_scale, 0.0)
        out_ref[...] = emb.astype(out_ref.dtype)

    return kernel


def _pad_ids(ids_flat, num_padded, pad_id):
    n = ids_flat.shape[0]
    if num_padded == n:
        return ids_flat
    return jnp.pad(ids_flat, (0, num_padded - n), constant_values=pad_id)


def word_embedding_forward(ids, table, *, emb_dim=None, dropout_p=0.0, training=False,
                           seed=0, rows_per_step=None, force_hbm_gather=False):
    """ids: int array, any shape. table: (ntoken+1, D) with row ntoken all-zero
    (padding_idx); D ideally already lane-padded to a multiple of 128 by
    init_word_embedding. Returns embeddings of shape ids.shape + (emb_dim,)."""
    vocab_rows, table_width = table.shape
    out_dtype = table.dtype
    if emb_dim is None:
        emb_dim = table_width

    emb_dim_padded = _round_up(table_width, _LANE)
    if emb_dim_padded != table_width:
        # Fallback only — for real GloVe-scale tables pad once at init, not per call.
        table = jnp.pad(table, ((0, 0), (0, emb_dim_padded - table_width)))

    itemsize = jnp.dtype(out_dtype).itemsize
    min_sub = _min_sublane(out_dtype)
    ids_flat = jnp.reshape(ids, (-1,)).astype(jnp.int32)
    num_tokens = int(ids_flat.shape[0])
    pad_id = vocab_rows - 1                     # the all-zero padding row

    # Tile height: big tiles for real workloads (amortize ~0.35us/step overhead,
    # lane/sublane-dense stores), rounded to the dtype-min sublane tile and
    # clamped so small workloads still give >= 2 grid steps (megacore on v7x).
    if rows_per_step is None:
        rows_per_step = 256
    rows_per_step = max(min_sub, _round_up(int(rows_per_step), min_sub))
    if num_tokens > min_sub:
        rows_per_step = min(rows_per_step, _round_up(-(-num_tokens // 2), min_sub))
    else:
        rows_per_step = min_sub

    num_steps = -(-max(num_tokens, 1) // rows_per_step)
    tile_bytes = rows_per_step * emb_dim_padded * itemsize
    table_bytes = vocab_rows * emb_dim_padded * itemsize
    use_vmem_table = (not force_hbm_gather) and table_bytes <= _VMEM_TABLE_BYTES_LIMIT

    seed_arr = jnp.array([seed], dtype=jnp.int32)

    if use_vmem_table:
        num_padded = num_steps * rows_per_step
        ids_padded = _pad_ids(ids_flat, num_padded, pad_id)
        kernel = _make_vmem_kernel(rows_per_step, dropout_p, training)
        cp_kwargs = {}
        needed = int(table_bytes + 8 * tile_bytes + (4 << 20))
        if needed > (16 << 20):
            cp_kwargs["vmem_limit_bytes"] = needed
        out = pl.pallas_call(
            kernel,
            out_shape=jax.ShapeDtypeStruct((num_padded, emb_dim_padded), out_dtype),
            grid_spec=pltpu.PrefetchScalarGridSpec(
                num_scalar_prefetch=2,                     # ids, seed -> SMEM
                grid=(num_steps,),
                in_specs=[pl.BlockSpec((vocab_rows, emb_dim_padded),
                                       lambda s, ids, seed: (0, 0))],  # table resident in VMEM
                out_specs=pl.BlockSpec((rows_per_step, emb_dim_padded),
                                       lambda s, ids, seed: (s, 0)),
            ),
            compiler_params=pltpu.CompilerParams(
                dimension_semantics=("parallel",), **cp_kwargs),
        )(ids_padded, seed_arr, table)
    else:
        n_chunks = 2 if num_steps >= 2 else 1              # outer "parallel" axis (megacore)
        steps_per_chunk = -(-num_steps // n_chunks)
        num_padded = n_chunks * steps_per_chunk * rows_per_step
        ids_padded = _pad_ids(ids_flat, num_padded, pad_id)
        kernel = _make_gather_kernel(rows_per_step, dropout_p, training)
        out = pl.pallas_call(
            kernel,
            out_shape=jax.ShapeDtypeStruct((num_padded, emb_dim_padded), out_dtype),
            grid_spec=pltpu.PrefetchScalarGridSpec(
                num_scalar_prefetch=2,                     # ids, seed -> SMEM
                grid=(n_chunks, steps_per_chunk),
                in_specs=[pl.BlockSpec(memory_space=pl.ANY)],   # table stays in HBM
                out_specs=pl.BlockSpec(
                    (rows_per_step, emb_dim_padded),
                    lambda c, i, ids, seed: (c * steps_per_chunk + i, 0)),
                scratch_shapes=[
                    pltpu.VMEM((2, rows_per_step, emb_dim_padded), out_dtype),  # double buffer
                    pltpu.SemaphoreType.DMA((2,)),                              # one sem / slot
                ],
            ),
            compiler_params=pltpu.CompilerParams(
                dimension_semantics=("parallel", "arbitrary")),
        )(ids_padded, seed_arr, table)

    out = out[:num_tokens, :emb_dim]
    return out.reshape(tuple(ids.shape) + (emb_dim,))


def init_word_embedding(ntoken, emb_dim, key):
    """nn.Embedding(ntoken+1, emb_dim, padding_idx=ntoken): N(0,1) init, zero pad row.
    The feature dim is lane-padded to a multiple of 128 here (one-time cost,
    hoisted out of the forward pass); the forward slices back to emb_dim."""
    table = jax.random.normal(key, (ntoken + 1, emb_dim), jnp.float32)
    table = table.at[ntoken].set(0.0)
    padded = _round_up(emb_dim, _LANE)
    if padded != emb_dim:
        table = jnp.pad(table, ((0, 0), (0, padded - emb_dim)))
    return table


def word_embedding_reference(ids, table, emb_dim):
    """Pure-JAX eval-mode reference (dropout = identity)."""
    return table[ids][..., :emb_dim]


if __name__ == "__main__":
    # TODO(synk): init_embedding (loading GloVe weights from an .npy file) is
    # host-side I/O and intentionally not part of the kernel.
    ntoken = 11          # vocab size; index `ntoken` is the padding row
    emb_dim = 300        # GloVe-like width; init pads the table to 384 lanes
    dropout_p = 0.5
    batch, seq = 2, 20   # 40 tokens -> multiple grid steps on both code paths

    key = jax.random.PRNGKey(0)
    k_emb, k_ids = jax.random.split(key)
    table = init_word_embedding(ntoken, emb_dim, k_emb)          # (12, 384), lane-padded
    ids = jax.random.randint(k_ids, (batch, seq), 0, ntoken, dtype=jnp.int32)
    ids = ids.at[0, -1].set(ntoken)                              # include a padding token

    ref = word_embedding_reference(ids, table, emb_dim)

    # Eval mode (dropout = identity), VMEM-resident-table fast path.
    out_eval = jax.block_until_ready(
        word_embedding_forward(ids, table, emb_dim=emb_dim,
                               dropout_p=dropout_p, training=False))
    assert out_eval.shape == (batch, seq, emb_dim)
    assert jnp.allclose(out_eval, ref, atol=1e-6, rtol=1e-6)
    assert bool(jnp.all(out_eval[0, -1] == 0.0))                 # padding_idx row is zero

    # Eval mode, forced HBM row-gather (double-buffered DMA) path.
    out_eval_g = jax.block_until_ready(
        word_embedding_forward(ids, table, emb_dim=emb_dim, dropout_p=dropout_p,
                               training=False, rows_per_step=8, force_hbm_gather=True))
    assert jnp.allclose(out_eval_g, ref, atol=1e-6, rtol=1e-6)

    # Train mode: inverted dropout — every element is 0 or emb/(1-p); the mask is
    # (seed, position)-deterministic, so both paths must agree exactly.
    out_train = jax.block_until_ready(
        word_embedding_forward(ids, table, emb_dim=emb_dim, dropout_p=dropout_p,
                               training=True, seed=123))
    out_train_g = jax.block_until_ready(
        word_embedding_forward(ids, table, emb_dim=emb_dim, dropout_p=dropout_p,
                               training=True, seed=123, rows_per_step=8,
                               force_hbm_gather=True))
    assert bool(jnp.array_equal(out_train, out_train_g))

    scaled = ref / (1.0 - dropout_p)
    is_zero = jnp.isclose(out_train, 0.0, atol=1e-6)
    is_scaled = jnp.isclose(out_train, scaled, atol=1e-5, rtol=1e-5)
    assert bool(jnp.all(is_zero | is_scaled))
    non_pad = (ids != ntoken)[..., None]                         # exclude padding tokens
    drop_frac = float(jnp.sum(jnp.where(non_pad, is_zero, 0.0)) /
                      (jnp.sum(non_pad) * emb_dim))
    assert 0.35 < drop_frac < 0.65, drop_frac

    print("KERNEL_OK")
</pallas_src>

<mosaic_0001>
module attributes {stable_mosaic.version = 11 : i64} {
  func.func @kernel(%arg0: i32, %arg1: memref<48xi32, #tpu.memory_space<smem>>, %arg2: memref<1xi32, #tpu.memory_space<smem>>, %arg3: memref<12x384xf32, #tpu.memory_space<vmem>>, %arg4: memref<24x384xf32, #tpu.memory_space<vmem>>) attributes {dimension_semantics = [#tpu.dimension_semantics<parallel>], iteration_bounds = array<i64: 2>, scalar_prefetch = 2 : i64, scratch_operands = 0 : i64, tpu.core_type = #tpu.core_type<tc>, window_params = [{pipeline_mode = #tpu.pipeline_mode<synchronous>, transform_indices = @transform_0, window_bounds = array<i64: 12, 384>}, {transform_indices = @transform_1, window_bounds = array<i64: 24, 384>}]} {
    %c24_i32 = arith.constant 24 : i32
    %0 = arith.muli %arg0, %c24_i32 : i32
    %c0_i32 = arith.constant 0 : i32
    %1 = arith.addi %0, %c0_i32 : i32
    %2 = arith.index_cast %1 : i32 to index
    %3 = memref.load %arg1[%2] : memref<48xi32, #tpu.memory_space<smem>>
    %4 = arith.index_cast %3 : i32 to index
    %c0 = arith.constant 0 : index
    %5 = vector.load %arg3[%4, %c0] : memref<12x384xf32, #tpu.memory_space<vmem>>, vector<1x384xf32>
    %c1_i32 = arith.constant 1 : i32
    %6 = arith.addi %0, %c1_i32 : i32
    %7 = arith.index_cast %6 : i32 to index
    %8 = memref.load %arg1[%7] : memref<48xi32, #tpu.memory_space<smem>>
    %9 = arith.index_cast %8 : i32 to index
    %c0_0 = arith.constant 0 : index
    %10 = vector.load %arg3[%9, %c0_0] : memref<12x384xf32, #tpu.memory_space<vmem>>, vector<1x384xf32>
    %c2_i32 = arith.constant 2 : i32
    %11 = arith.addi %0, %c2_i32 : i32
    %12 = arith.index_cast %11 : i32 to index
    %13 = memref.load %arg1[%12] : memref<48xi32, #tpu.memory_space<smem>>
    %14 = arith.index_cast %13 : i32 to index
    %c0_1 = arith.constant 0 : index
    %15 = vector.load %arg3[%14, %c0_1] : memref<12x384xf32, #tpu.memory_space<vmem>>, vector<1x384xf32>
    %c3_i32 = arith.constant 3 : i32
    %16 = arith.addi %0, %c3_i32 : i32
    %17 = arith.index_cast %16 : i32 to index
    %18 = memref.load %arg1[%17] : memref<48xi32, #tpu.memory_space<smem>>
    %19 = arith.index_cast %18 : i32 to index
    %c0_2 = arith.constant 0 : index
    %20 = vector.load %arg3[%19, %c0_2] : memref<12x384xf32, #tpu.memory_space<vmem>>, vector<1x384xf32>
    %c4_i32 = arith.constant 4 : i32
    %21 = arith.addi %0, %c4_i32 : i32
    %22 = arith.index_cast %21 : i32 to index
    %23 = memref.load %arg1[%22] : memref<48xi32, #tpu.memory_space<smem>>
    %24 = arith.index_cast %23 : i32 to index
    %c0_3 = arith.constant 0 : index
    %25 = vector.load %arg3[%24, %c0_3] : memref<12x384xf32, #tpu.memory_space<vmem>>, vector<1x384xf32>
    %c5_i32 = arith.constant 5 : i32
    %26 = arith.addi %0, %c5_i32 : i32
    %27 = arith.index_cast %26 : i32 to index
    %28 = memref.load %arg1[%27] : memref<48xi32, #tpu.memory_space<smem>>
    %29 = arith.index_cast %28 : i32 to index
    %c0_4 = arith.constant 0 : index
    %30 = vector.load %arg3[%29, %c0_4] : memref<12x384xf32, #tpu.memory_space<vmem>>, vector<1x384xf32>
    %c6_i32 = arith.constant 6 : i32
    %31 = arith.addi %0, %c6_i32 : i32
    %32 = arith.index_cast %31 : i32 to index
    %33 = memref.load %arg1[%32] : memref<48xi32, #tpu.memory_space<smem>>
    %34 = arith.index_cast %33 : i32 to index
    %c0_5 = arith.constant 0 : index
    %35 = vector.load %arg3[%34, %c0_5] : memref<12x384xf32, #tpu.memory_space<vmem>>, vector<1x384xf32>
    %c7_i32 = arith.constant 7 : i32
    %36 = arith.addi %0, %c7_i32 : i32
    %37 = arith.index_cast %36 : i32 to index
    %38 = memref.load %arg1[%37] : memref<48xi32, #tpu.memory_space<smem>>
    %39 = arith.index_cast %38 : i32 to index
    %c0_6 = arith.constant 0 : index
    %40 = vector.load %arg3[%39, %c0_6] : memref<12x384xf32, #tpu.memory_space<vmem>>, vector<1x384xf32>
    %c8_i32 = arith.constant 8 : i32
    %41 = arith.addi %0, %c8_i32 : i32
    %42 = arith.index_cast %41 : i32 to index
    %43 = memref.load %arg1[%42] : memref<48xi32, #tpu.memory_space<smem>>
    %44 = arith.index_cast %43 : i32 to index
    %c0_7 = arith.constant 0 : index
    %45 = vector.load %arg3[%44, %c0_7] : memref<12x384xf32, #tpu.memory_space<vmem>>, vector<1x384xf32>
    %c9_i32 = arith.constant 9 : i32
    %46 = arith.addi %0, %c9_i32 : i32
    %47 = arith.index_cast %46 : i32 to index
    %48 = memref.load %arg1[%47] : memref<48xi32, #tpu.memory_space<smem>>
    %49 = arith.index_cast %48 : i32 to index
    %c0_8 = arith.constant 0 : index
    %50 = vector.load %arg3[%49, %c0_8] : memref<12x384xf32, #tpu.memory_space<vmem>>, vector<1x384xf32>
    %c10_i32 = arith.constant 10 : i32
    %51 = arith.addi %0, %c10_i32 : i32
    %52 = arith.index_cast %51 : i32 to index
    %53 = memref.load %arg1[%52] : memref<48xi32, #tpu.memory_space<smem>>
    %54 = arith.index_cast %53 : i32 to index
    %c0_9 = arith.constant 0 : index
    %55 = vector.load %arg3[%54, %c0_9] : memref<12x384xf32, #tpu.memory_space<vmem>>, vector<1x384xf32>
    %c11_i32 = arith.constant 11 : i32
    %56 = arith.addi %0, %c11_i32 : i32
    %57 = arith.index_cast %56 : i32 to index
    %58 = memref.load %arg1[%57] : memref<48xi32, #tpu.memory_space<smem>>
    %59 = arith.index_cast %58 : i32 to index
    %c0_10 = arith.constant 0 : index
    %60 = vector.load %arg3[%59, %c0_10] : memref<12x384xf32, #tpu.memory_space<vmem>>, vector<1x384xf32>
    %c12_i32 = arith.constant 12 : i32
    %61 = arith.addi %0, %c12_i32 : i32
    %62 = arith.index_cast %61 : i32 to index
    %63 = memref.load %arg1[%62] : memref<48xi32, #tpu.memory_space<smem>>
    %64 = arith.index_cast %63 : i32 to index
    %c0_11 = arith.constant 0 : index
    %65 = vector.load %arg3[%64, %c0_11] : memref<12x384xf32, #tpu.memory_space<vmem>>, vector<1x384xf32>
    %c13_i32 = arith.constant 13 : i32
    %66 = arith.addi %0, %c13_i32 : i32
    %67 = arith.index_cast %66 : i32 to index
    %68 = memref.load %arg1[%67] : memref<48xi32, #tpu.memory_space<smem>>
    %69 = arith.index_cast %68 : i32 to index
    %c0_12 = arith.constant 0 : index
    %70 = vector.load %arg3[%69, %c0_12] : memref<12x384xf32, #tpu.memory_space<vmem>>, vector<1x384xf32>
    %c14_i32 = arith.constant 14 : i32
    %71 = arith.addi %0, %c14_i32 : i32
    %72 = arith.index_cast %71 : i32 to index
    %73 = memref.load %arg1[%72] : memref<48xi32, #tpu.memory_space<smem>>
    %74 = arith.index_cast %73 : i32 to index
    %c0_13 = arith.constant 0 : index
    %75 = vector.load %arg3[%74, %c0_13] : memref<12x384xf32, #tpu.memory_space<vmem>>, vector<1x384xf32>
    %c15_i32 = arith.constant 15 : i32
    %76 = arith.addi %0, %c15_i32 : i32
    %77 = arith.index_cast %76 : i32 to index
    %78 = memref.load %arg1[%77] : memref<48xi32, #tpu.memory_space<smem>>
    %79 = arith.index_cast %78 : i32 to index
    %c0_14 = arith.constant 0 : index
    %80 = vector.load %arg3[%79, %c0_14] : memref<12x384xf32, #tpu.memory_space<vmem>>, vector<1x384xf32>
    %c16_i32 = arith.constant 16 : i32
    %81 = arith.addi %0, %c16_i32 : i32
    %82 = arith.index_cast %81 : i32 to index
    %83 = memref.load %arg1[%82] : memref<48xi32, #tpu.memory_space<smem>>
    %84 = arith.index_cast %83 : i32 to index
    %c0_15 = arith.constant 0 : index
    %85 = vector.load %arg3[%84, %c0_15] : memref<12x384xf32, #tpu.memory_space<vmem>>, vector<1x384xf32>
    %c17_i32 = arith.constant 17 : i32
    %86 = arith.addi %0, %c17_i32 : i32
    %87 = arith.index_cast %86 : i32 to index
    %88 = memref.load %arg1[%87] : memref<48xi32, #tpu.memory_space<smem>>
    %89 = arith.index_cast %88 : i32 to index
    %c0_16 = arith.constant 0 : index
    %90 = vector.load %arg3[%89, %c0_16] : memref<12x384xf32, #tpu.memory_space<vmem>>, vector<1x384xf32>
    %c18_i32 = arith.constant 18 : i32
    %91 = arith.addi %0, %c18_i32 : i32
    %92 = arith.index_cast %91 : i32 to index
    %93 = memref.load %arg1[%92] : memref<48xi32, #tpu.memory_space<smem>>
    %94 = arith.index_cast %93 : i32 to index
    %c0_17 = arith.constant 0 : index
    %95 = vector.load %arg3[%94, %c0_17] : memref<12x384xf32, #tpu.memory_space<vmem>>, vector<1x384xf32>
    %c19_i32 = arith.constant 19 : i32
    %96 = arith.addi %0, %c19_i32 : i32
    %97 = arith.index_cast %96 : i32 to index
    %98 = memref.load %arg1[%97] : memref<48xi32, #tpu.memory_space<smem>>
    %99 = arith.index_cast %98 : i32 to index
    %c0_18 = arith.constant 0 : index
    %100 = vector.load %arg3[%99, %c0_18] : memref<12x384xf32, #tpu.memory_space<vmem>>, vector<1x384xf32>
    %c20_i32 = arith.constant 20 : i32
    %101 = arith.addi %0, %c20_i32 : i32
    %102 = arith.index_cast %101 : i32 to index
    %103 = memref.load %arg1[%102] : memref<48xi32, #tpu.memory_space<smem>>
    %104 = arith.index_cast %103 : i32 to index
    %c0_19 = arith.constant 0 : index
    %105 = vector.load %arg3[%104, %c0_19] : memref<12x384xf32, #tpu.memory_space<vmem>>, vector<1x384xf32>
    %c21_i32 = arith.constant 21 : i32
    %106 = arith.addi %0, %c21_i32 : i32
    %107 = arith.index_cast %106 : i32 to index
    %108 = memref.load %arg1[%107] : memref<48xi32, #tpu.memory_space<smem>>
    %109 = arith.index_cast %108 : i32 to index
    %c0_20 = arith.constant 0 : index
    %110 = vector.load %arg3[%109, %c0_20] : memref<12x384xf32, #tpu.memory_space<vmem>>, vector<1x384xf32>
    %c22_i32 = arith.constant 22 : i32
    %111 = arith.addi %0, %c22_i32 : i32
    %112 = arith.index_cast %111 : i32 to index
    %113 = memref.load %arg1[%112] : memref<48xi32, #tpu.memory_space<smem>>
    %114 = arith.index_cast %113 : i32 to index
    %c0_21 = arith.constant 0 : index
    %115 = vector.load %arg3[%114, %c0_21] : memref<12x384xf32, #tpu.memory_space<vmem>>, vector<1x384xf32>
    %c23_i32 = arith.constant 23 : i32
    %116 = arith.addi %0, %c23_i32 : i32
    %117 = arith.index_cast %116 : i32 to index
    %118 = memref.load %arg1[%117] : memref<48xi32, #tpu.memory_space<smem>>
    %119 = arith.index_cast %118 : i32 to index
    %c0_22 = arith.constant 0 : index
    %120 = vector.load %arg3[%119, %c0_22] : memref<12x384xf32, #tpu.memory_space<vmem>>, vector<1x384xf32>
    %121 = tpu.concatenate %5, %10, %15, %20, %25, %30, %35, %40, %45, %50, %55, %60, %65, %70, %75, %80 in 0 : vector<1x384xf32>, vector<1x384xf32>, vector<1x384xf32>, vector<1x384xf32>, vector<1x384xf32>, vector<1x384xf32>, vector<1x384xf32>, vector<1x384xf32>, vector<1x384xf32>, vector<1x384xf32>, vector<1x384xf32>, vector<1x384xf32>, vector<1x384xf32>, vector<1x384xf32>, vector<1x384xf32>, vector<1x384xf32> -> vector<16x384xf32>
    %122 = tpu.concatenate %85, %90, %95, %100, %105, %110, %115, %120 in 0 : vector<1x384xf32>, vector<1x384xf32>, vector<1x384xf32>, vector<1x384xf32>, vector<1x384xf32>, vector<1x384xf32>, vector<1x384xf32>, vector<1x384xf32> -> vector<8x384xf32>
    %123 = tpu.concatenate %121, %122 in 0 : vector<16x384xf32>, vector<8x384xf32> -> vector<24x384xf32>
    %c0_23 = arith.constant 0 : index
    %c0_24 = arith.constant 0 : index
    %124 = vector.load %arg4[%c0_23, %c0_24] : memref<24x384xf32, #tpu.memory_space<vmem>>, vector<24x384xf32>
    tpu.vector_store %arg4[%c0_23, %c0_24], %123 {strides = array<i32>} : memref<24x384xf32, #tpu.memory_space<vmem>>, vector<24x384xf32>,
    return
  }
  func.func @transform_0(%arg0: i32, %arg1: memref<48xi32, #tpu.memory_space<smem>>, %arg2: memref<1xi32, #tpu.memory_space<smem>>) -> (i32, i32) {
    %c0_i32 = arith.constant 0 : i32
    %c0_i32_0 = arith.constant 0 : i32
    %c0_i32_1 = arith.constant 0 : i32
    return %c0_i32, %c0_i32_0 : i32, i32
  }
  func.func @transform_1(%arg0: i32, %arg1: memref<48xi32, #tpu.memory_space<smem>>, %arg2: memref<1xi32, #tpu.memory_space<smem>>) -> (i32, i32) {
    %c0_i32 = arith.constant 0 : i32
    %c0_i32_0 = arith.constant 0 : i32
    return %arg0, %c0_i32 : i32, i32
  }
}

</mosaic_0001>

<llo_original>
// kernel: tpu_custom_call.1
$region0: #{tpu_custom_call.1}
  #allocation0 [shape = 'u32[]', space=smem, size = 0x4, offset = 0x4, fixed_abs, tag = 'smem constant byte address 0x4 - core index']
  #allocation1 [shape = 'u32[144,128]{1,0:T(1,128)}', space=vmem, size = 0x12000, scoped, tag = 'internal scratch']
  #allocation2 [shape = 's32[1]{0}', space=sflag, size = 0x4, scoped, tag = 'scoped memory for tpu_custom_call.1']
  #allocation3 [shape = 'u8[512]{0}', space=smem, size = 0x200, scoped, tag = 'prefetched SMEM operand 0']
  #allocation4 [shape = 's32[1]{0:T(128)S(6)}', space=smem, size = 0x200, scoped, tag = 'prefetched SMEM operand 1']
  %s0 = inlined_call_operand.vmem [shape: s32[48], index: 0, kind: input, shape index: {}]
  %s1 = inlined_call_operand.<no memory space> [shape: s32[1], index: 1, kind: input, shape index: {}]
  %s2 = inlined_call_operand.hbm [shape: f32[12,384], index: 2, kind: input, shape index: {}]
  %s3 = inlined_call_operand.hbm [shape: f32[48,384], index: 3, kind: output, shape index: {}]
  %s4 = sld [smem:[#allocation0]]
  $region41: #{tpu_custom_call.1} parent=0
    _
  %s6 = ssub.s32 1, %s4
  %s7 = scalar_select 0, %s6, %s4
  %s8 = sshll.u32 %s0, 4
  %s9 = int_to_ptr.vmem [resolvable:$true] %s8
  %11 = dma.vmem_to_smem %s9, 16, [#allocation3], [#allocation2]
  %12 = sst [smem:[#allocation4]] %s1
  %13 = dma.done [#allocation2], 16
  %14 = sfence
  $region1: #{tpu_custom_call.1} parent=0
    #allocation5 [shape = 'u8[24576]{0}', space=vmem, size = 0x6000, scoped, tag = 'input window, operand 2, single buffered']
    #allocation6 [shape = 's32[2]{0}', space=sflag, size = 0x8, scoped, tag = 'scoped memory for tpu_custom_call.1']
    #allocation7 [shape = 's32[2]{0}', space=sflag, size = 0x8, scoped, tag = 'scoped memory for tpu_custom_call.1']
    #allocation8 [shape = 'u8[73728]{0}', space=vmem, size = 0x12000, scoped, tag = 'output window, operand 0']
    %15 = vsyncpa [#allocation6], 0
    %16 = vsyncpa [#allocation7], 0
    %s17 = scalar_lea.sflag [#allocation7], 1
    %18 = vsyncpa %s17, 0
    loop: start=0, step=1, limit=4
    $region2: #{tpu_custom_call.1} parent=1 // loop_pre_header
      _
    $region3: #{tpu_custom_call.1} parent=1 // loop_header
      %s20 = sphi 0, %s24
      %p21 = scmp.ge.s32.totalorder %s20, 4
      %s28 = sphi 0, %s28
      %s30 = sphi 0, %s28
      %s31 = sphi 0, %s30
      %s45 = sphi 0, %s31
      %s51 = sphi 0, %s53
      %s54 = sphi 0, %s51
      %s55 = sphi 0, %s54
      %s71 = sphi 0, %s55
    $region4: #{tpu_custom_call.1} parent=1 // loop_header_branch
      %23 = sbr.rel (%p21) target = $region8
    $region5: #{tpu_custom_call.1} parent=1 // loop_body
      %s25 = ssub.s32 %s20, 1
      %s26 = ssub.s32 %s20, 2
      %s27 = sadd.s32 %s20, 1
      %s29 = sadd.s32 %s28, 1
      %p32 = scmp.eq.s32.totalorder %s20, 1
      %p33 = scmp.ne.s32.totalorder %s28, %s30
      %p34 = scmp.eq.s32.totalorder %s20, 0
      %p35 = por %p33, %p34
      %p36 = scmp.ne.s32.totalorder %s28, %s30
      %p37 = scmp.eq.s32.totalorder %s25, 1
      %p38 = por %p36, %p37
      %p39 = scmp.ne.s32.totalorder %s30, %s31
      %p40 = scmp.eq.s32.totalorder %s25, 0
      %p41 = por %p39, %p40
      %p42 = scmp.ne.s32.totalorder %s30, %s31
      %p43 = scmp.eq.s32.totalorder %s26, 1
      %p44 = por %p42, %p43
      %p46 = scmp.ne.s32.totalorder %s31, %s45
      %p47 = scmp.eq.s32.totalorder %s26, 0
      %p48 = por %p46, %p47
      %s49 = ssub.s32 %s20, %s27
      %p50 = scmp.eq.s32.totalorder %s49, 0
      %s52 = sadd.s32 %s51, 1
      %s53 = scalar_select %p50, %s51, %s52
      %p56 = pneg %p50
      %p57 = scmp.eq.s32.totalorder %s20, 1
      %p58 = por %p56, %p57
      %p59 = scmp.ne.s32.totalorder %s51, %s54
      %p60 = scmp.eq.s32.totalorder %s20, 0
      %p61 = por %p59, %p60
      %p62 = scmp.ne.s32.totalorder %s51, %s54
      %p63 = scmp.eq.s32.totalorder %s25, 1
      %p64 = por %p62, %p63
      %p65 = scmp.ne.s32.totalorder %s54, %s55
      %p66 = scmp.eq.s32.totalorder %s25, 0
      %p67 = por %p65, %p66
      %p68 = scmp.ne.s32.totalorder %s54, %s55
      %p69 = scmp.eq.s32.totalorder %s26, 1
      %p70 = por %p68, %p69
      %p72 = scmp.ne.s32.totalorder %s55, %s71
      %p73 = scmp.eq.s32.totalorder %s26, 0
      %p74 = por %p72, %p73
      %p75 = scmp.le.s32.totalorder 1, %s20
      %p76 = scmp.lt.s32.totalorder %s20, 3
      %p77 = pnand %p75, %p76
      %p78 = pneg %p77
      // Predicated region
      $region9: #{tpu_custom_call.1} parent=5 // pred_check
        _
      $region10: #{tpu_custom_call.1} parent=5 // pred_check_branch
        %80 = sbr.rel (%p77) target = $region12
      $region11: #{tpu_custom_call.1} parent=5 // pred_region
        %s81 = ssub.s32 %s20, 1
        // Predicated region
        $region13: #{tpu_custom_call.1} parent=11 // pred_check
          %p82 = pneg %p41
        $region14: #{tpu_custom_call.1} parent=11 // pred_check_branch
          %84 = sbr.rel (%p82) target = $region16
        $region15: #{tpu_custom_call.1} parent=11 // pred_region
          %s86 = ssub.s32 768, 768
          %87 = vsyncadd [#allocation6], %s86
          %s88 = sshll.u32 [#allocation5], 4
          %s89 = int_to_ptr.vmem [resolvable:$true] %s88
          %94 = dma.hbm_to_vmem [thread:$0]  %s2, 768, %s89, [#allocation6], 384, 384, 24
        $region16: #{tpu_custom_call.1} parent=11 // pred_fallthru
          _
      $region12: #{tpu_custom_call.1} parent=5 // pred_fallthru
        _
      %p95 = scmp.lt.s32.totalorder %s20, 2
      // Predicated region
      $region17: #{tpu_custom_call.1} parent=5 // pred_check
        %p96 = pneg %p95
      $region18: #{tpu_custom_call.1} parent=5 // pred_check_branch
        %98 = sbr.rel (%p96) target = $region20
      $region19: #{tpu_custom_call.1} parent=5 // pred_region
        _
      $region20: #{tpu_custom_call.1} parent=5 // pred_fallthru
        _
      %p99 = scmp.le.s32.totalorder 1, %s20
      %p100 = scmp.lt.s32.totalorder %s20, 3
      %p101 = pnand %p99, %p100
      %p102 = pneg %p101
      // Predicated region
      $region21: #{tpu_custom_call.1} parent=5 // pred_check
        _
      $region22: #{tpu_custom_call.1} parent=5 // pred_check_branch
        %104 = sbr.rel (%p101) target = $region24
      $region23: #{tpu_custom_call.1} parent=5 // pred_region
        %s105 = ssub.s32 %s20, 1
        // Predicated region
        $region25: #{tpu_custom_call.1} parent=23 // pred_check
          %p106 = pneg %p41
        $region26: #{tpu_custom_call.1} parent=23 // pred_check_branch
          %108 = sbr.rel (%p106) target = $region28
        $region27: #{tpu_custom_call.1} parent=23 // pred_region
          %109 = dma.done [#allocation6], 768
        $region28: #{tpu_custom_call.1} parent=23 // pred_fallthru
          _
        %p110 = pneg %p41
        %p111 = pneg %p38
        %p112 = pneg %p67
        %p113 = pneg %p64
        %s114 = sand.u32 %s54, 1
        %s115 = scalar_lea.sflag [#allocation7], %s114
        %s116 = sand.u32 %s54, 1
        %s117 = smul.addr %s116, 72
        %s118 = scalar_lea.vmem [#allocation8], %s117
        %s119 = smul.u32 3, %s25
        %s120 = smul.u32 %s25, 24
        %s121 = sld [smem:[#allocation3 + %s120]]
        %s122 = sshra.s32 %s121, 3
        %s123 = sand.u32 %s121, 7
        %s124 = sshra.s32 %s121, 3
        %s125 = sand.u32 %s121, 7
        %s126 = smul.u32 %s122, 3
        %s127 = smul.u32 %s126, 8
        %s128 = sadd.s32 %s127, %s125
        %s129 = scalar_lea.vmem [#allocation5], %s128
        %v130 = vld [vmem:[%s129] ss:$8 sm:$0x7]
        %s131 = sadd.s32 %s120, 1
        %s132 = sld [smem:[#allocation3 + %s131]]
        %s133 = sshra.s32 %s132, 3
        %s134 = sand.u32 %s132, 7
        %s135 = sshra.s32 %s132, 3
        %s136 = sand.u32 %s132, 7
        %s137 = smul.u32 %s133, 3
        %s138 = smul.u32 %s137, 8
        %s139 = sadd.s32 %s138, %s136
        %s140 = scalar_lea.vmem [#allocation5], %s139
        %v141 = vld [vmem:[%s140] ss:$8 sm:$0x7]
        %s142 = sadd.s32 %s120, 2
        %s143 = sld [smem:[#allocation3 + %s142]]
        %s144 = sshra.s32 %s143, 3
        %s145 = sand.u32 %s143, 7
        %s146 = sshra.s32 %s143, 3
        %s147 = sand.u32 %s143, 7
        %s148 = smul.u32 %s144, 3
        %s149 = smul.u32 %s148, 8
        %s150 = sadd.s32 %s149, %s147
        %s151 = scalar_lea.vmem [#allocation5], %s150
        %v152 = vld [vmem:[%s151] ss:$8 sm:$0x7]
        %s153 = sadd.s32 %s120, 3
        %s154 = sld [smem:[#allocation3 + %s153]]
        %s155 = sshra.s32 %s154, 3
        %s156 = sand.u32 %s154, 7
        %s157 = sshra.s32 %s154, 3
        %s158 = sand.u32 %s154, 7
        %s159 = smul.u32 %s155, 3
        %s160 = smul.u32 %s159, 8
        %s161 = sadd.s32 %s160, %s158
        %s162 = scalar_lea.vmem [#allocation5], %s161
        %v163 = vld [vmem:[%s162] ss:$8 sm:$0x7]
        %s164 = sadd.s32 %s120, 4
        %s165 = sld [smem:[#allocation3 + %s164]]
        %s166 = sshra.s32 %s165, 3
        %s167 = sand.u32 %s165, 7
        %s168 = sshra.s32 %s165, 3
        %s169 = sand.u32 %s165, 7
        %s170 = smul.u32 %s166, 3
        %s171 = smul.u32 %s170, 8
        %s172 = sadd.s32 %s171, %s169
        %s173 = scalar_lea.vmem [#allocation5], %s172
        %v174 = vld [vmem:[%s173] ss:$8 sm:$0x7]
        %s175 = sadd.s32 %s120, 5
        %s176 = sld [smem:[#allocation3 + %s175]]
        %s177 = sshra.s32 %s176, 3
        %s178 = sand.u32 %s176, 7
        %s179 = sshra.s32 %s176, 3
        %s180 = sand.u32 %s176, 7
        %s181 = smul.u32 %s177, 3
        %s182 = smul.u32 %s181, 8
        %s183 = sadd.s32 %s182, %s180
        %s184 = scalar_lea.vmem [#allocation5], %s183
        %v185 = vld [vmem:[%s184] ss:$8 sm:$0x7]
        %s186 = sadd.s32 %s120, 6
        %s187 = sld [smem:[#allocation3 + %s186]]
        %s188 = sshra.s32 %s187, 3
        %s189 = sand.u32 %s187, 7
        %s190 = sshra.s32 %s187, 3
        %s191 = sand.u32 %s187, 7
        %s192 = smul.u32 %s188, 3
        %s193 = smul.u32 %s192, 8
        %s194 = sadd.s32 %s193, %s191
        %s195 = scalar_lea.vmem [#allocation5], %s194
        %v196 = vld [vmem:[%s195] ss:$8 sm:$0x7]
        %s197 = sadd.s32 %s120, 7
        %s198 = sld [smem:[#allocation3 + %s197]]
        %s199 = sshra.s32 %s198, 3
        %s200 = sand.u32 %s198, 7
        %s201 = sshra.s32 %s198, 3
        %s202 = sand.u32 %s198, 7
        %s203 = smul.u32 %s199, 3
        %s204 = smul.u32 %s203, 8
        %s205 = sadd.s32 %s204, %s202
        %s206 = scalar_lea.vmem [#allocation5], %s205
        %v207 = vld [vmem:[%s206] ss:$8 sm:$0x7]
        %s208 = sadd.s32 %s120, 8
        %s209 = sld [smem:[#allocation3 + %s208]]
        %s210 = sshra.s32 %s209, 3
        %s211 = sand.u32 %s209, 7
        %s212 = sshra.s32 %s209, 3
        %s213 = sand.u32 %s209, 7
        %s214 = smul.u32 %s210, 3
        %s215 = smul.u32 %s214, 8
        %s216 = sadd.s32 %s215, %s213
        %s217 = scalar_lea.vmem [#allocation5], %s216
        %v218 = vld [vmem:[%s217] ss:$8 sm:$0x7]
        %s219 = sadd.s32 %s120, 9
        %s220 = sld [smem:[#allocation3 + %s219]]
        %s221 = sshra.s32 %s220, 3
        %s222 = sand.u32 %s220, 7
        %s223 = sshra.s32 %s220, 3
        %s224 = sand.u32 %s220, 7
        %s225 = smul.u32 %s221, 3
        %s226 = smul.u32 %s225, 8
        %s227 = sadd.s32 %s226, %s224
        %s228 = scalar_lea.vmem [#allocation5], %s227
        %v229 = vld [vmem:[%s228] ss:$8 sm:$0x7]
        %s230 = sadd.s32 %s120, 10
        %s231 = sld [smem:[#allocation3 + %s230]]
        %s232 = sshra.s32 %s231, 3
        %s233 = sand.u32 %s231, 7
        %s234 = sshra.s32 %s231, 3
        %s235 = sand.u32 %s231, 7
        %s236 = smul.u32 %s232, 3
        %s237 = smul.u32 %s236, 8
        %s238 = sadd.s32 %s237, %s235
        %s239 = scalar_lea.vmem [#allocation5], %s238
        %v240 = vld [vmem:[%s239] ss:$8 sm:$0x7]
        %s241 = sadd.s32 %s120, 11
        %s242 = sld [smem:[#allocation3 + %s241]]
        %s243 = sshra.s32 %s242, 3
        %s244 = sand.u32 %s242, 7
        %s245 = sshra.s32 %s242, 3
        %s246 = sand.u32 %s242, 7
        %s247 = smul.u32 %s243, 3
        %s248 = smul.u32 %s247, 8
        %s249 = sadd.s32 %s248, %s246
        %s250 = scalar_lea.vmem [#allocation5], %s249
        %v251 = vld [vmem:[%s250] ss:$8 sm:$0x7]
        %s252 = sadd.s32 %s120, 12
        %s253 = sld [smem:[#allocation3 + %s252]]
        %s254 = sshra.s32 %s253, 3
        %s255 = sand.u32 %s253, 7
        %s256 = sshra.s32 %s253, 3
        %s257 = sand.u32 %s253, 7
        %s258 = smul.u32 %s254, 3
        %s259 = smul.u32 %s258, 8
        %s260 = sadd.s32 %s259, %s257
        %s261 = scalar_lea.vmem [#allocation5], %s260
        %v262 = vld [vmem:[%s261] ss:$8 sm:$0x7]
        %s263 = sadd.s32 %s120, 13
        %s264 = sld [smem:[#allocation3 + %s263]]
        %s265 = sshra.s32 %s264, 3
        %s266 = sand.u32 %s264, 7
        %s267 = sshra.s32 %s264, 3
        %s268 = sand.u32 %s264, 7
        %s269 = smul.u32 %s265, 3
        %s270 = smul.u32 %s269, 8
        %s271 = sadd.s32 %s270, %s268
        %s272 = scalar_lea.vmem [#allocation5], %s271
        %v273 = vld [vmem:[%s272] ss:$8 sm:$0x7]
        %s274 = sadd.s32 %s120, 14
        %s275 = sld [smem:[#allocation3 + %s274]]
        %s276 = sshra.s32 %s275, 3
        %s277 = sand.u32 %s275, 7
        %s278 = sshra.s32 %s275, 3
        %s279 = sand.u32 %s275, 7
        %s280 = smul.u32 %s276, 3
        %s281 = smul.u32 %s280, 8
        %s282 = sadd.s32 %s281, %s279
        %s283 = scalar_lea.vmem [#allocation5], %s282
        %v284 = vld [vmem:[%s283] ss:$8 sm:$0x7]
        %s285 = sadd.s32 %s120, 15
        %s286 = sld [smem:[#allocation3 + %s285]]
        %s287 = sshra.s32 %s286, 3
        %s288 = sand.u32 %s286, 7
        %s289 = sshra.s32 %s286, 3
        %s290 = sand.u32 %s286, 7
        %s291 = smul.u32 %s287, 3
        %s292 = smul.u32 %s291, 8
        %s293 = sadd.s32 %s292, %s290
        %s294 = scalar_lea.vmem [#allocation5], %s293
        %v295 = vld [vmem:[%s294] ss:$8 sm:$0x7]
        %s296 = sadd.s32 %s120, 16
        %s297 = sld [smem:[#allocation3 + %s296]]
        %s298 = sshra.s32 %s297, 3
        %s299 = sand.u32 %s297, 7
        %s300 = sshra.s32 %s297, 3
        %s301 = sand.u32 %s297, 7
        %s302 = smul.u32 %s298, 3
        %s303 = smul.u32 %s302, 8
        %s304 = sadd.s32 %s303, %s301
        %s305 = scalar_lea.vmem [#allocation5], %s304
        %v306 = vld [vmem:[%s305] ss:$8 sm:$0x7]
        %s307 = sadd.s32 %s120, 17
        %s308 = sld [smem:[#allocation3 + %s307]]
        %s309 = sshra.s32 %s308, 3
        %s310 = sand.u32 %s308, 7
        %s311 = sshra.s32 %s308, 3
        %s312 = sand.u32 %s308, 7
        %s313 = smul.u32 %s309, 3
        %s314 = smul.u32 %s313, 8
        %s315 = sadd.s32 %s314, %s312
        %s316 = scalar_lea.vmem [#allocation5], %s315
        %v317 = vld [vmem:[%s316] ss:$8 sm:$0x7]
        %s318 = sadd.s32 %s120, 18
        %s319 = sld [smem:[#allocation3 + %s318]]
        %s320 = sshra.s32 %s319, 3
        %s321 = sand.u32 %s319, 7
        %s322 = sshra.s32 %s319, 3
        %s323 = sand.u32 %s319, 7
        %s324 = smul.u32 %s320, 3
        %s325 = smul.u32 %s324, 8
        %s326 = sadd.s32 %s325, %s323
        %s327 = scalar_lea.vmem [#allocation5], %s326
        %v328 = vld [vmem:[%s327] ss:$8 sm:$0x7]
        %s329 = sadd.s32 %s120, 19
        %s330 = sld [smem:[#allocation3 + %s329]]
        %s331 = sshra.s32 %s330, 3
        %s332 = sand.u32 %s330, 7
        %s333 = sshra.s32 %s330, 3
        %s334 = sand.u32 %s330, 7
        %s335 = smul.u32 %s331, 3
        %s336 = smul.u32 %s335, 8
        %s337 = sadd.s32 %s336, %s334
        %s338 = scalar_lea.vmem [#allocation5], %s337
        %v339 = vld [vmem:[%s338] ss:$8 sm:$0x7]
        %s340 = sadd.s32 %s120, 20
        %s341 = sld [smem:[#allocation3 + %s340]]
        %s342 = sshra.s32 %s341, 3
        %s343 = sand.u32 %s341, 7
        %s344 = sshra.s32 %s341, 3
        %s345 = sand.u32 %s341, 7
        %s346 = smul.u32 %s342, 3
        %s347 = smul.u32 %s346, 8
        %s348 = sadd.s32 %s347, %s345
        %s349 = scalar_lea.vmem [#allocation5], %s348
        %v350 = vld [vmem:[%s349] ss:$8 sm:$0x7]
        %s351 = sadd.s32 %s120, 21
        %s352 = sld [smem:[#allocation3 + %s351]]
        %s353 = sshra.s32 %s352, 3
        %s354 = sand.u32 %s352, 7
        %s355 = sshra.s32 %s352, 3
        %s356 = sand.u32 %s352, 7
        %s357 = smul.u32 %s353, 3
        %s358 = smul.u32 %s357, 8
        %s359 = sadd.s32 %s358, %s356
        %s360 = scalar_lea.vmem [#allocation5], %s359
        %v361 = vld [vmem:[%s360] ss:$8 sm:$0x7]
        %s362 = sadd.s32 %s120, 22
        %s363 = sld [smem:[#allocation3 + %s362]]
        %s364 = sshra.s32 %s363, 3
        %s365 = sand.u32 %s363, 7
        %s366 = sshra.s32 %s363, 3
        %s367 = sand.u32 %s363, 7
        %s368 = smul.u32 %s364, 3
        %s369 = smul.u32 %s368, 8
        %s370 = sadd.s32 %s369, %s367
        %s371 = scalar_lea.vmem [#allocation5], %s370
        %v372 = vld [vmem:[%s371] ss:$8 sm:$0x7]
        %s373 = sadd.s32 %s120, 23
        %s374 = sld [smem:[#allocation3 + %s373]]
        %s375 = sshra.s32 %s374, 3
        %s376 = sand.u32 %s374, 7
        %s377 = sshra.s32 %s374, 3
        %s378 = sand.u32 %s374, 7
        %s379 = smul.u32 %s375, 3
        %s380 = smul.u32 %s379, 8
        %s381 = sadd.s32 %s380, %s378
        %s382 = scalar_lea.vmem [#allocation5], %s381
        %v383 = vld [vmem:[%s382] ss:$8 sm:$0x7]
        %v385 = vlaneseq
        %v386 = vshrl.u32 %v385, 7
        %v387 = vsub.s32 0, %v386
        %v388 = vrot.slane %v130, %v387
        %v389 = vlaneseq
        %v390 = vshrl.u32 %v389, 7
        %v391 = vsub.s32 1, %v390
        %v392 = vrot.slane %v130, %v391
        %v393 = vlaneseq
        %v394 = vshrl.u32 %v393, 7
        %v395 = vsub.s32 2, %v394
        %v396 = vrot.slane %v130, %v395
        %v401 = vlaneseq
        %v402 = vshrl.u32 %v401, 7
        %v403 = vsub.s32 0, %v402
        %v404 = vrot.slane %v141, %v403
        %v405 = vlaneseq
        %v406 = vshrl.u32 %v405, 7
        %v407 = vsub.s32 1, %v406
        %v408 = vrot.slane %v141, %v407
        %v409 = vlaneseq
        %v410 = vshrl.u32 %v409, 7
        %v411 = vsub.s32 2, %v410
        %v412 = vrot.slane %v141, %v411
        %v417 = vlaneseq
        %v418 = vshrl.u32 %v417, 7
        %v419 = vsub.s32 0, %v418
        %v420 = vrot.slane %v152, %v419
        %v421 = vlaneseq
        %v422 = vshrl.u32 %v421, 7
        %v423 = vsub.s32 1, %v422
        %v424 = vrot.slane %v152, %v423
        %v425 = vlaneseq
        %v426 = vshrl.u32 %v425, 7
        %v427 = vsub.s32 2, %v426
        %v428 = vrot.slane %v152, %v427
        %v433 = vlaneseq
        %v434 = vshrl.u32 %v433, 7
        %v435 = vsub.s32 0, %v434
        %v436 = vrot.slane %v163, %v435
        %v437 = vlaneseq
        %v438 = vshrl.u32 %v437, 7
        %v439 = vsub.s32 1, %v438
        %v440 = vrot.slane %v163, %v439
        %v441 = vlaneseq
        %v442 = vshrl.u32 %v441, 7
        %v443 = vsub.s32 2, %v442
        %v444 = vrot.slane %v163, %v443
        %v449 = vlaneseq
        %v450 = vshrl.u32 %v449, 7
        %v451 = vsub.s32 0, %v450
        %v452 = vrot.slane %v174, %v451
        %v453 = vlaneseq
        %v454 = vshrl.u32 %v453, 7
        %v455 = vsub.s32 1, %v454
        %v456 = vrot.slane %v174, %v455
        %v457 = vlaneseq
        %v458 = vshrl.u32 %v457, 7
        %v459 = vsub.s32 2, %v458
        %v460 = vrot.slane %v174, %v459
        %v465 = vlaneseq
        %v466 = vshrl.u32 %v465, 7
        %v467 = vsub.s32 0, %v466
        %v468 = vrot.slane %v185, %v467
        %v469 = vlaneseq
        %v470 = vshrl.u32 %v469, 7
        %v471 = vsub.s32 1, %v470
        %v472 = vrot.slane %v185, %v471
        %v473 = vlaneseq
        %v474 = vshrl.u32 %v473, 7
        %v475 = vsub.s32 2, %v474
        %v476 = vrot.slane %v185, %v475
        %v481 = vlaneseq
        %v482 = vshrl.u32 %v481, 7
        %v483 = vsub.s32 0, %v482
        %v484 = vrot.slane %v196, %v483
        %v485 = vlaneseq
        %v486 = vshrl.u32 %v485, 7
        %v487 = vsub.s32 1, %v486
        %v488 = vrot.slane %v196, %v487
        %v489 = vlaneseq
        %v490 = vshrl.u32 %v489, 7
        %v491 = vsub.s32 2, %v490
        %v492 = vrot.slane %v196, %v491
        %v497 = vlaneseq
        %v498 = vshrl.u32 %v497, 7
        %v499 = vsub.s32 0, %v498
        %v500 = vrot.slane %v207, %v499
        %v501 = vlaneseq
        %v502 = vshrl.u32 %v501, 7
        %v503 = vsub.s32 1, %v502
        %v504 = vrot.slane %v207, %v503
        %v505 = vlaneseq
        %v506 = vshrl.u32 %v505, 7
        %v507 = vsub.s32 2, %v506
        %v508 = vrot.slane %v207, %v507
        %v513 = vlaneseq
        %v514 = vshrl.u32 %v513, 7
        %v515 = vsub.s32 0, %v514
        %v516 = vrot.slane %v218, %v515
        %v517 = vlaneseq
        %v518 = vshrl.u32 %v517, 7
        %v519 = vsub.s32 1, %v518
        %v520 = vrot.slane %v218, %v519
        %v521 = vlaneseq
        %v522 = vshrl.u32 %v521, 7
        %v523 = vsub.s32 2, %v522
        %v524 = vrot.slane %v218, %v523
        %v529 = vlaneseq
        %v530 = vshrl.u32 %v529, 7
        %v531 = vsub.s32 0, %v530
        %v532 = vrot.slane %v229, %v531
        %v533 = vlaneseq
        %v534 = vshrl.u32 %v533, 7
        %v535 = vsub.s32 1, %v534
        %v536 = vrot.slane %v229, %v535
        %v537 = vlaneseq
        %v538 = vshrl.u32 %v537, 7
        %v539 = vsub.s32 2, %v538
        %v540 = vrot.slane %v229, %v539
        %v545 = vlaneseq
        %v546 = vshrl.u32 %v545, 7
        %v547 = vsub.s32 0, %v546
        %v548 = vrot.slane %v240, %v547
        %v549 = vlaneseq
        %v550 = vshrl.u32 %v549, 7
        %v551 = vsub.s32 1, %v550
        %v552 = vrot.slane %v240, %v551
        %v553 = vlaneseq
        %v554 = vshrl.u32 %v553, 7
        %v555 = vsub.s32 2, %v554
        %v556 = vrot.slane %v240, %v555
        %v561 = vlaneseq
        %v562 = vshrl.u32 %v561, 7
        %v563 = vsub.s32 0, %v562
        %v564 = vrot.slane %v251, %v563
        %v565 = vlaneseq
        %v566 = vshrl.u32 %v565, 7
        %v567 = vsub.s32 1, %v566
        %v568 = vrot.slane %v251, %v567
        %v569 = vlaneseq
        %v570 = vshrl.u32 %v569, 7
        %v571 = vsub.s32 2, %v570
        %v572 = vrot.slane %v251, %v571
        %v577 = vlaneseq
        %v578 = vshrl.u32 %v577, 7
        %v579 = vsub.s32 0, %v578
        %v580 = vrot.slane %v262, %v579
        %v581 = vlaneseq
        %v582 = vshrl.u32 %v581, 7
        %v583 = vsub.s32 1, %v582
        %v584 = vrot.slane %v262, %v583
        %v585 = vlaneseq
        %v586 = vshrl.u32 %v585, 7
        %v587 = vsub.s32 2, %v586
        %v588 = vrot.slane %v262, %v587
        %v593 = vlaneseq
        %v594 = vshrl.u32 %v593, 7
        %v595 = vsub.s32 0, %v594
        %v596 = vrot.slane %v273, %v595
        %v597 = vlaneseq
        %v598 = vshrl.u32 %v597, 7
        %v599 = vsub.s32 1, %v598
        %v600 = vrot.slane %v273, %v599
        %v601 = vlaneseq
        %v602 = vshrl.u32 %v601, 7
        %v603 = vsub.s32 2, %v602
        %v604 = vrot.slane %v273, %v603
        %v609 = vlaneseq
        %v610 = vshrl.u32 %v609, 7
        %v611 = vsub.s32 0, %v610
        %v612 = vrot.slane %v284, %v611
        %v613 = vlaneseq
        %v614 = vshrl.u32 %v613, 7
        %v615 = vsub.s32 1, %v614
        %v616 = vrot.slane %v284, %v615
        %v617 = vlaneseq
        %v618 = vshrl.u32 %v617, 7
        %v619 = vsub.s32 2, %v618
        %v620 = vrot.slane %v284, %v619
        %v625 = vlaneseq
        %v626 = vshrl.u32 %v625, 7
        %v627 = vsub.s32 0, %v626
        %v628 = vrot.slane %v295, %v627
        %v629 = vlaneseq
        %v630 = vshrl.u32 %v629, 7
        %v631 = vsub.s32 1, %v630
        %v632 = vrot.slane %v295, %v631
        %v633 = vlaneseq
        %v634 = vshrl.u32 %v633, 7
        %v635 = vsub.s32 2, %v634
        %v636 = vrot.slane %v295, %v635
        %vm640 = vcmask 1040384
        %v641 = vsel %vm640, %v388, %v404
        %v642 = vsel %vm640, %v392, %v408
        %v643 = vsel %vm640, %v396, %v412
        %vm644 = vcmask 1041408
        %v645 = vsel %vm644, %v641, %v420
        %v646 = vsel %vm644, %v642, %v424
        %v647 = vsel %vm644, %v643, %v428
        %vm648 = vcmask 1042432
        %v649 = vsel %vm648, %v645, %v436
        %v650 = vsel %vm648, %v646, %v440
        %v651 = vsel %vm648, %v647, %v444
        %vm652 = vcmask 1043456
        %v653 = vsel %vm652, %v649, %v452
        %v654 = vsel %vm652, %v650, %v456
        %v655 = vsel %vm652, %v651, %v460
        %vm656 = vcmask 1044480
        %v657 = vsel %vm656, %v653, %v468
        %v658 = vsel %vm656, %v654, %v472
        %v659 = vsel %vm656, %v655, %v476
        %vm660 = vcmask 1045504
        %v661 = vsel %vm660, %v657, %v484
        %v662 = vsel %vm660, %v658, %v488
        %v663 = vsel %vm660, %v659, %v492
        %vm664 = vcmask 1046528
        %v665 = vsel %vm664, %v661, %v500
        %v666 = vsel %vm664, %v662, %v504
        %v667 = vsel %vm664, %v663, %v508
        %v668 = vsel %vm640, %v516, %v532
        %v669 = vsel %vm640, %v520, %v536
        %v670 = vsel %vm640, %v524, %v540
        %v671 = vsel %vm644, %v668, %v548
        %v672 = vsel %vm644, %v669, %v552
        %v673 = vsel %vm644, %v670, %v556
        %v674 = vsel %vm648, %v671, %v564
        %v675 = vsel %vm648, %v672, %v568
        %v676 = vsel %vm648, %v673, %v572
        %v677 = vsel %vm652, %v674, %v580
        %v678 = vsel %vm652, %v675, %v584
        %v679 = vsel %vm652, %v676, %v588
        %v680 = vsel %vm656, %v677, %v596
        %v681 = vsel %vm656, %v678, %v600
        %v682 = vsel %vm656, %v679, %v604
        %v683 = vsel %vm660, %v680, %v612
        %v684 = vsel %vm660, %v681, %v616
        %v685 = vsel %vm660, %v682, %v620
        %v686 = vsel %vm664, %v683, %v628
        %v687 = vsel %vm664, %v684, %v632
        %v688 = vsel %vm664, %v685, %v636
        %v690 = vlaneseq
        %v691 = vshrl.u32 %v690, 7
        %v692 = vsub.s32 0, %v691
        %v693 = vrot.slane %v306, %v692
        %v694 = vlaneseq
        %v695 = vshrl.u32 %v694, 7
        %v696 = vsub.s32 1, %v695
        %v697 = vrot.slane %v306, %v696
        %v698 = vlaneseq
        %v699 = vshrl.u32 %v698, 7
        %v700 = vsub.s32 2, %v699
        %v701 = vrot.slane %v306, %v700
        %v706 = vlaneseq
        %v707 = vshrl.u32 %v706, 7
        %v708 = vsub.s32 0, %v707
        %v709 = vrot.slane %v317, %v708
        %v710 = vlaneseq
        %v711 = vshrl.u32 %v710, 7
        %v712 = vsub.s32 1, %v711
        %v713 = vrot.slane %v317, %v712
        %v714 = vlaneseq
        %v715 = vshrl.u32 %v714, 7
        %v716 = vsub.s32 2, %v715
        %v717 = vrot.slane %v317, %v716
        %v722 = vlaneseq
        %v723 = vshrl.u32 %v722, 7
        %v724 = vsub.s32 0, %v723
        %v725 = vrot.slane %v328, %v724
        %v726 = vlaneseq
        %v727 = vshrl.u32 %v726, 7
        %v728 = vsub.s32 1, %v727
        %v729 = vrot.slane %v328, %v728
        %v730 = vlaneseq
        %v731 = vshrl.u32 %v730, 7
        %v732 = vsub.s32 2, %v731
        %v733 = vrot.slane %v328, %v732
        %v738 = vlaneseq
        %v739 = vshrl.u32 %v738, 7
        %v740 = vsub.s32 0, %v739
        %v741 = vrot.slane %v339, %v740
        %v742 = vlaneseq
        %v743 = vshrl.u32 %v742, 7
        %v744 = vsub.s32 1, %v743
        %v745 = vrot.slane %v339, %v744
        %v746 = vlaneseq
        %v747 = vshrl.u32 %v746, 7
        %v748 = vsub.s32 2, %v747
        %v749 = vrot.slane %v339, %v748
        %v754 = vlaneseq
        %v755 = vshrl.u32 %v754, 7
        %v756 = vsub.s32 0, %v755
        %v757 = vrot.slane %v350, %v756
        %v758 = vlaneseq
        %v759 = vshrl.u32 %v758, 7
        %v760 = vsub.s32 1, %v759
        %v761 = vrot.slane %v350, %v760
        %v762 = vlaneseq
        %v763 = vshrl.u32 %v762, 7
        %v764 = vsub.s32 2, %v763
        %v765 = vrot.slane %v350, %v764
        %v770 = vlaneseq
        %v771 = vshrl.u32 %v770, 7
        %v772 = vsub.s32 0, %v771
        %v773 = vrot.slane %v361, %v772
        %v774 = vlaneseq
        %v775 = vshrl.u32 %v774, 7
        %v776 = vsub.s32 1, %v775
        %v777 = vrot.slane %v361, %v776
        %v778 = vlaneseq
        %v779 = vshrl.u32 %v778, 7
        %v780 = vsub.s32 2, %v779
        %v781 = vrot.slane %v361, %v780
        %v786 = vlaneseq
        %v787 = vshrl.u32 %v786, 7
        %v788 = vsub.s32 0, %v787
        %v789 = vrot.slane %v372, %v788
        %v790 = vlaneseq
        %v791 = vshrl.u32 %v790, 7
        %v792 = vsub.s32 1, %v791
        %v793 = vrot.slane %v372, %v792
        %v794 = vlaneseq
        %v795 = vshrl.u32 %v794, 7
        %v796 = vsub.s32 2, %v795
        %v797 = vrot.slane %v372, %v796
        %v802 = vlaneseq
        %v803 = vshrl.u32 %v802, 7
        %v804 = vsub.s32 0, %v803
        %v805 = vrot.slane %v383, %v804
        %v806 = vlaneseq
        %v807 = vshrl.u32 %v806, 7
        %v808 = vsub.s32 1, %v807
        %v809 = vrot.slane %v383, %v808
        %v810 = vlaneseq
        %v811 = vshrl.u32 %v810, 7
        %v812 = vsub.s32 2, %v811
        %v813 = vrot.slane %v383, %v812
        %v817 = vsel %vm640, %v693, %v709
        %v818 = vsel %vm640, %v697, %v713
        %v819 = vsel %vm640, %v701, %v717
        %v820 = vsel %vm644, %v817, %v725
        %v821 = vsel %vm644, %v818, %v729
        %v822 = vsel %vm644, %v819, %v733
        %v823 = vsel %vm648, %v820, %v741
        %v824 = vsel %vm648, %v821, %v745
        %v825 = vsel %vm648, %v822, %v749
        %v826 = vsel %vm652, %v823, %v757
        %v827 = vsel %vm652, %v824, %v761
        %v828 = vsel %vm652, %v825, %v765
        %v829 = vsel %vm656, %v826, %v773
        %v830 = vsel %vm656, %v827, %v777
        %v831 = vsel %vm656, %v828, %v781
        %v832 = vsel %vm660, %v829, %v789
        %v833 = vsel %vm660, %v830, %v793
        %v834 = vsel %vm660, %v831, %v797
        %v835 = vsel %vm664, %v832, %v805
        %v836 = vsel %vm664, %v833, %v809
        %v837 = vsel %vm664, %v834, %v813
        %838 = vst [vmem:[%s118] sm:$0xff] %v665
        %839 = vst [vmem:[%s118 + $0x8] sm:$0xff] %v666
        %840 = vst [vmem:[%s118 + $0x10] sm:$0xff] %v667
        %841 = vst [vmem:[%s118 + $0x18] sm:$0xff] %v686
        %842 = vst [vmem:[%s118 + $0x20] sm:$0xff] %v687
        %843 = vst [vmem:[%s118 + $0x28] sm:$0xff] %v688
        %844 = vst [vmem:[%s118 + $0x30] sm:$0xff] %v835
        %845 = vst [vmem:[%s118 + $0x38] sm:$0xff] %v836
        %846 = vst [vmem:[%s118 + $0x40] sm:$0xff] %v837
        %s847 = sand.u32 %s54, 1
        %s848 = scalar_lea.sflag [#allocation7], %s847
        %s849 = sand.u32 %s54, 1
        %s850 = smul.addr %s849, 72
        %s851 = scalar_lea.vmem [#allocation8], %s850
        // Predicated region
        $region29: #{tpu_custom_call.1} parent=23 // pred_check
          %p852 = pneg %p64
        $region30: #{tpu_custom_call.1} parent=23 // pred_check_branch
          %854 = sbr.rel (%p852) target = $region32
        $region31: #{tpu_custom_call.1} parent=23 // pred_region
          %s855 = smul.u32 3, %s25
          %s857 = ssub.s32 1152, 1152
          %858 = vsyncadd %s848, %s857
          %s859 = smul.addr %s855, 3
          %s860 = smul.addr %s859, 128
          %s861 = scalar_lea.hbm %s3, %s860
          %s862 = sshll.u32 %s851, 4
          %s863 = int_to_ptr.vmem [resolvable:$true] %s862
          %868 = dma.vmem_to_hbm [thread:$0]  %s863, 1152, %s861, %s848, 384, 384, 24
        $region32: #{tpu_custom_call.1} parent=23 // pred_fallthru
          _
      $region24: #{tpu_custom_call.1} parent=5 // pred_fallthru
        _
      %p869 = scmp.le.s32.totalorder 2, %s20
      // Predicated region
      $region33: #{tpu_custom_call.1} parent=5 // pred_check
        %p870 = pneg %p869
      $region34: #{tpu_custom_call.1} parent=5 // pred_check_branch
        %872 = sbr.rel (%p870) target = $region36
      $region35: #{tpu_custom_call.1} parent=5 // pred_region
        %s873 = ssub.s32 %s20, 2
        // Predicated region
        $region37: #{tpu_custom_call.1} parent=35 // pred_check
          %p874 = pneg %p70
        $region38: #{tpu_custom_call.1} parent=35 // pred_check_branch
          %876 = sbr.rel (%p874) target = $region40
        $region39: #{tpu_custom_call.1} parent=35 // pred_region
          %s877 = sand.u32 %s55, 1
          %s878 = scalar_lea.sflag [#allocation7], %s877
          %s879 = sand.u32 %s55, 1
          %s880 = smul.addr %s879, 72
          %s881 = scalar_lea.vmem [#allocation8], %s880
          %882 = dma.done %s878, 1152
        $region40: #{tpu_custom_call.1} parent=35 // pred_fallthru
          _
      $region36: #{tpu_custom_call.1} parent=5 // pred_fallthru
        _
    $region6: #{tpu_custom_call.1} parent=1 // loop_footer
      %s24 = sadd.s32 1, %s20
    $region7: #{tpu_custom_call.1} parent=1 // loop_footer_branch
      %19 = sbr.rel target = $region3
    $region8: #{tpu_custom_call.1} parent=1 // loop_exit
      _
    %883 = vsyncpa [#allocation6], 1
    %s884 = scalar_lea.sflag [#allocation6], 1
    %885 = vsyncpa %s884, 1
    %886 = vsyncpa [#allocation7], 1
    %s887 = scalar_lea.sflag [#allocation7], 1
    %888 = vsyncpa %s887, 1

</llo_original>
